<compile_context>
chip_gen: v7x
topology: tpu7x:2x2x1
jax: 0.10.0
libtpu: 0.0.40
codegen_flags: <defaults>
</compile_context>

<pallas_src>
import jax
import jax.numpy as jnp
import numpy as np
from jax import lax
from jax.experimental import pallas as pl
from jax.experimental.pallas import tpu as pltpu


# ---------------- block-size helpers ----------------
def _vmem_capacity_bytes():
    try:
        info = pltpu.get_tpu_info()
        cap = getattr(info, "vmem_capacity_bytes", None)
        if cap:
            return int(cap)
    except Exception:
        pass
    return 64 * 1024 * 1024  # conservative (v7x per-core VMEM)


def _pick_dim_block(n, cap):
    """Block for a dim that lands in the sublane (second-to-last) position:
    must equal n or be a multiple of 8 that divides n; never exceeds cap
    unless the layout rules force the full extent."""
    cap = int(max(8, cap))
    if n <= cap:
        return n
    for d in range(min(n, cap), 7, -1):
        if d % 8 == 0 and n % d == 0:
            return d
    return n


def _pick_any_block(n, cap):
    """Block for a leading (untiled) dim: largest divisor of n that is <= cap."""
    cap = int(max(1, cap))
    if n <= cap:
        return n
    for d in range(min(n, cap), 0, -1):
        if n % d == 0:
            return d
    return 1


# ------ Kernel 1: fused (linear1 + input gate projection), per-gate output ------
def _gate_proj_kernel(x_ref, w_ref, b_ref, o_ref):
    # One gate per inner grid step: y_g = x @ (W1^T Wih_g^T) + b_g.
    # Store is dense from lane 0 for any F (no in-kernel lane split).
    o_ref[0] = (
        jnp.dot(x_ref[...], w_ref[0], preferred_element_type=jnp.float32)
        + b_ref[0]
    )


def gate_proj_pallas(x2d, w_gates, b_gates, tm, vmem_limit):
    M, F = x2d.shape
    return pl.pallas_call(
        _gate_proj_kernel,
        grid=(M // tm, 4),
        in_specs=[
            pl.BlockSpec((tm, F), lambda i, g: (i, 0)),       # x rows (reused across g)
            pl.BlockSpec((1, F, F), lambda i, g: (g, 0, 0)),  # folded weight, per gate
            pl.BlockSpec((1, 1, F), lambda i, g: (g, 0, 0)),  # folded bias, per gate
        ],
        out_specs=pl.BlockSpec((1, tm, F), lambda i, g: (g, i, 0)),
        out_shape=jax.ShapeDtypeStruct((4, M, F), jnp.float32),
        compiler_params=pltpu.CompilerParams(
            dimension_semantics=("parallel", "parallel"),
            vmem_limit_bytes=vmem_limit,
        ),
    )(x2d, w_gates, b_gates)


# ------ Kernel 2: LSTM recurrence (batch-parallel x time-chunk grid) ------
def _make_lstm_kernel(tc, F, fused, unroll):
    def kernel(gx_ref, whh_ref, hseq_ref, hn_ref, h_scr, c_scr):
        @pl.when(pl.program_id(1) == 0)   # first time-chunk of this batch block
        def _():
            h_scr[...] = jnp.zeros_like(h_scr)
            c_scr[...] = jnp.zeros_like(c_scr)

        # Hoist the stationary recurrent weights out of the serial time loop.
        if fused:
            w_cat = whh_ref[...]          # (F, 4F), gate order i|f|g|o, 128-aligned
        else:
            w_i = whh_ref[0]
            w_f = whh_ref[1]
            w_g = whh_ref[2]
            w_o = whh_ref[3]

        def step(t, carry):
            h, c = carry
            if fused:
                hz = jnp.dot(h, w_cat, preferred_element_type=jnp.float32)
                pre_i = gx_ref[0, t] + hz[:, 0 * F:1 * F]
                pre_f = gx_ref[1, t] + hz[:, 1 * F:2 * F]
                pre_g = gx_ref[2, t] + hz[:, 2 * F:3 * F]
                pre_o = gx_ref[3, t] + hz[:, 3 * F:4 * F]
            else:
                pre_i = gx_ref[0, t] + jnp.dot(h, w_i, preferred_element_type=jnp.float32)
                pre_f = gx_ref[1, t] + jnp.dot(h, w_f, preferred_element_type=jnp.float32)
                pre_g = gx_ref[2, t] + jnp.dot(h, w_g, preferred_element_type=jnp.float32)
                pre_o = gx_ref[3, t] + jnp.dot(h, w_o, preferred_element_type=jnp.float32)
            i_g = jax.nn.sigmoid(pre_i)
            f_g = jax.nn.sigmoid(pre_f)
            g_g = jnp.tanh(pre_g)
            o_g = jax.nn.sigmoid(pre_o)
            c = f_g * c + i_g * g_g
            h = o_g * jnp.tanh(c)
            hseq_ref[t] = h               # contiguous (bb, F) slab (time-major layout)
            return h, c

        h, c = lax.fori_loop(0, tc, step, (h_scr[...], c_scr[...]), unroll=unroll)
        h_scr[...] = h
        c_scr[...] = c
        hn_ref[...] = h                   # resident over the time axis; last chunk == hn
    return kernel


def lstm_pallas(gates_x_tm, whh_arg, tc, bb, fused, unroll, vmem_limit):
    _, T, B, F = gates_x_tm.shape
    if fused:
        whh_spec = pl.BlockSpec((F, 4 * F), lambda b, c: (0, 0))
    else:
        whh_spec = pl.BlockSpec((4, F, F), lambda b, c: (0, 0, 0))
    kernel = _make_lstm_kernel(tc, F, fused, unroll)
    return pl.pallas_call(
        kernel,
        grid=(B // bb, T // tc),          # batch blocks outer (parallel), time inner
        in_specs=[
            pl.BlockSpec((4, tc, bb, F), lambda b, c: (0, c, b, 0)),  # per-gate gates_x
            whh_spec,                                                 # stationary Whh^T
        ],
        out_specs=[
            pl.BlockSpec((tc, bb, F), lambda b, c: (c, b, 0)),        # hseq (time-major)
            pl.BlockSpec((bb, F), lambda b, c: (b, 0)),               # hn
        ],
        out_shape=[
            jax.ShapeDtypeStruct((T, B, F), jnp.float32),
            jax.ShapeDtypeStruct((B, F), jnp.float32),
        ],
        scratch_shapes=[
            pltpu.VMEM((bb, F), jnp.float32),  # h carry
            pltpu.VMEM((bb, F), jnp.float32),  # c carry
        ],
        compiler_params=pltpu.CompilerParams(
            dimension_semantics=("parallel", "arbitrary"),
            vmem_limit_bytes=vmem_limit,
        ),
    )(gates_x_tm, whh_arg)


# ------ Kernel 3: attention (softmax over T) + linear2, fused F-reductions ------
def _attn_kernel(x_ref, hn_ref, w2_ref, b2_ref, o_ref):
    x = x_ref[...]                                    # (T, bb, F) time-major hseq
    hn = hn_ref[...]                                  # (bb, F)
    w2 = w2_ref[0]                                    # (F,)
    # One streaming pass over x yields both reductions over F.
    scores = jnp.sum(x * hn[None, :, :], axis=-1)     # (T, bb) == bmm(hs, hn)
    proj = jnp.sum(x * w2[None, None, :], axis=-1)    # (T, bb) == hs @ w2^T
    m = jnp.max(scores, axis=0, keepdims=True)
    e = jnp.exp(scores - m)
    w = e / jnp.sum(e, axis=0, keepdims=True)         # softmax over time
    out = w * proj + b2_ref[0]                        # (T, bb)
    o_ref[...] = out.T                                # (bb, T), batch-major output


def attn_linear_pallas(hseq_tm, hn, w2_row, b2, bb, vmem_limit):
    T, B, F = hseq_tm.shape
    return pl.pallas_call(
        _attn_kernel,
        grid=(B // bb,),
        in_specs=[
            pl.BlockSpec((T, bb, F), lambda b: (0, b, 0)),
            pl.BlockSpec((bb, F), lambda b: (b, 0)),
            pl.BlockSpec((1, F), lambda b: (0, 0)),
            pl.BlockSpec(memory_space=pltpu.MemorySpace.SMEM),   # b2 scalar in SMEM
        ],
        out_specs=pl.BlockSpec((bb, T), lambda b: (b, 0)),
        out_shape=jax.ShapeDtypeStruct((B, T), jnp.float32),
        compiler_params=pltpu.CompilerParams(
            dimension_semantics=("parallel",),
            vmem_limit_bytes=vmem_limit,
        ),
    )(hseq_tm, hn, w2_row, b2)


# ---------------- Full forward (glue in plain JAX) ----------------
def lstm_attn_forward(x, params):
    B, T, F = x.shape
    w1, b1 = params["w1"], params["b1"]            # (F, F), (F,)
    wih, whh = params["wih"], params["whh"]        # (4F, F), (4F, F)
    bih, bhh = params["bih"], params["bhh"]        # (4F,), (4F,)
    w2, b2 = params["w2"], params["b2"]            # (1, F), (1,)

    # Fold linear1 into the hoisted input projection (tiny one-time param matmuls, f32).
    w_fold = w1.T @ wih.T                          # (F, 4F), gate order i|f|g|o
    b_fold = b1 @ wih.T + bih + bhh                # (4F,)
    w_gates = jnp.transpose(w_fold.reshape(F, 4, F), (1, 0, 2))   # (4, F, F)
    b_gates = b_fold.reshape(4, 1, F)                              # (4, 1, F)

    fused = (F % 128 == 0)                         # fuse recurrent matmuls when aligned
    if fused:
        whh_arg = whh.T                            # (F, 4F): [Whh_i^T | Whh_f^T | ...]
    else:
        whh_arg = jnp.transpose(whh.reshape(4, F, F), (0, 2, 1))   # (4, F, F): Whh_g^T

    # ---- generation-aware block sizing (v5e/v6e: 128 MiB VMEM, v7x: 64 MiB) ----
    M = B * T
    vmem_cap = _vmem_capacity_bytes()
    vmem_limit = int(vmem_cap * 3 // 4)            # explicit scoped-VMEM limit
    budget = vmem_limit // 2                       # target working set (headroom for 2x bufs)

    # kernel 1: 2x(x) + 2x(out) blocks of tm*F f32 + per-gate weight
    tm_cap = (budget - 8 * F * F) // (16 * F)
    tm = _pick_dim_block(M, min(max(tm_cap, 8), 2048))

    # kernel 2: batch block (>=2 blocks when B is large so v7x's second TC has work)
    bb_cap = B if B <= 8 else max(8, min(256, B // 2))
    bb_l = _pick_dim_block(B, bb_cap)
    tc_cap = (budget - 16 * F * F - 16 * bb_l * F) // (40 * bb_l * F)
    tc = _pick_any_block(T, min(max(tc_cap, 1), 64))
    unroll = min(tc, 8)                            # modest unroll: LLO visibility, no spills

    # kernel 3: batch block sized from VMEM (streams the full hseq tensor)
    bb3_cap = budget // (8 * T * F + 8 * F + 8 * T)
    bb3 = _pick_dim_block(B, max(bb3_cap, 1))

    # Stage 1: gate projection, fed time-major so (4, M, F) == (4, T, B, F) for free.
    x_tm = jnp.transpose(x, (1, 0, 2)).reshape(M, F)
    gates = gate_proj_pallas(x_tm, w_gates, b_gates, tm, vmem_limit)  # (4, T*B, F)
    gates_x = gates.reshape(4, T, B, F)                               # free reshape

    # Stage 2: serial recurrence (only carries the unavoidable h @ Whh_g^T work).
    hseq_tm, hn = lstm_pallas(gates_x, whh_arg, tc, bb_l, fused, unroll, vmem_limit)

    # Stage 3: attention softmax over T + linear2, fused reductions over F.
    out = attn_linear_pallas(hseq_tm, hn, w2.reshape(1, F), b2.reshape(1),
                             bb3, vmem_limit)                          # (B, T)
    return out.reshape(B, T, 1)


# ---------------- Pure-JAX reference (for verification) ----------------
def lstm_attn_reference(x, params):
    B, T, F = x.shape
    w1, b1 = params["w1"], params["b1"]
    wih, whh = params["wih"], params["whh"]
    bih, bhh = params["bih"], params["bhh"]
    w2, b2 = params["w2"], params["b2"]

    xl = x @ w1.T + b1

    def step(carry, xt):
        h, c = carry
        gates = xt @ wih.T + bih + h @ whh.T + bhh
        i_g = jax.nn.sigmoid(gates[:, 0:F])
        f_g = jax.nn.sigmoid(gates[:, F:2 * F])
        g_g = jnp.tanh(gates[:, 2 * F:3 * F])
        o_g = jax.nn.sigmoid(gates[:, 3 * F:4 * F])
        c = f_g * c + i_g * g_g
        h = o_g * jnp.tanh(c)
        return (h, c), h

    h0 = jnp.zeros((B, F), jnp.float32)
    (hT, _), hs = lax.scan(step, (h0, h0), jnp.transpose(xl, (1, 0, 2)))
    hs = jnp.transpose(hs, (1, 0, 2))                       # (B, T, F)
    hn = hT.reshape(B, F, 1)
    attn = jnp.einsum("btf,bfo->bto", hs, hn)               # (B, T, 1)
    w = jax.nn.softmax(attn, axis=1)
    xw = hs * w
    return xw @ w2.T + b2                                   # (B, T, 1)


def init_params(key, F):
    ks = jax.random.split(key, 8)
    bound1 = 1.0 / np.sqrt(F)
    u = lambda k, shape, b: jax.random.uniform(k, shape, jnp.float32, -b, b)
    return {
        "w1": u(ks[0], (F, F), bound1),
        "b1": u(ks[1], (F,), bound1),
        "wih": u(ks[2], (4 * F, F), bound1),
        "whh": u(ks[3], (4 * F, F), bound1),
        "bih": u(ks[4], (4 * F,), bound1),
        "bhh": u(ks[5], (4 * F,), bound1),
        "w2": u(ks[6], (1, F), bound1),
        "b2": u(ks[7], (1,), bound1),
    }


if __name__ == "__main__":
    B, T, F = 2, 8, 32  # batch, sequence length, in_feature
    key = jax.random.PRNGKey(0)
    k_x, k_p = jax.random.split(key)
    x = jax.random.normal(k_x, (B, T, F), dtype=jnp.float32)
    params = init_params(k_p, F)

    out = jax.block_until_ready(lstm_attn_forward(x, params))
    ref = jax.block_until_ready(lstm_attn_reference(x, params))

    assert out.shape == (B, T, 1), out.shape
    np.testing.assert_allclose(np.asarray(out), np.asarray(ref), rtol=1e-4, atol=1e-4)
    print("KERNEL_OK")
</pallas_src>

<mosaic_0001>
module attributes {stable_mosaic.version = 11 : i64} {
  func.func @_gate_proj_kernel(%arg0: i32, %arg1: i32, %arg2: memref<16x32xf32, #tpu.memory_space<vmem>>, %arg3: memref<1x32x32xf32, #tpu.memory_space<vmem>>, %arg4: memref<1x1x32xf32, #tpu.memory_space<vmem>>, %arg5: memref<1x16x32xf32, #tpu.memory_space<vmem>>) attributes {dimension_semantics = [#tpu.dimension_semantics<parallel>, #tpu.dimension_semantics<parallel>], iteration_bounds = array<i64: 1, 4>, scalar_prefetch = 0 : i64, scratch_operands = 0 : i64, tpu.core_type = #tpu.core_type<tc>, window_params = [{transform_indices = @transform_0, window_bounds = array<i64: 16, 32>}, {transform_indices = @transform_1, window_bounds = array<i64: 1, 32, 32>}, {transform_indices = @transform_2, window_bounds = array<i64: 1, 1, 32>}, {transform_indices = @transform_3, window_bounds = array<i64: 1, 16, 32>}]} {
    %c0 = arith.constant 0 : index
    %c0_0 = arith.constant 0 : index
    %0 = vector.load %arg2[%c0, %c0_0] : memref<16x32xf32, #tpu.memory_space<vmem>>, vector<16x32xf32>
    %c0_1 = arith.constant 0 : index
    %c0_2 = arith.constant 0 : index
    %c0_3 = arith.constant 0 : index
    %1 = vector.load %arg3[%c0_1, %c0_2, %c0_3] : memref<1x32x32xf32, #tpu.memory_space<vmem>>, vector<1x32x32xf32>
    %2 = vector.shape_cast %1 : vector<1x32x32xf32> to vector<32x32xf32>
    %cst = arith.constant dense<0.000000e+00> : vector<16x32xf32>
    %3 = tpu.matmul %0, %2, %cst {dimension_numbers = #tpu.dot_dimension_numbers<[1], [0], [0], [1], [0, 0, 1, 1], [], []>} : vector<16x32xf32>, vector<32x32xf32>, vector<16x32xf32> -> vector<16x32xf32>
    %c0_4 = arith.constant 0 : index
    %c0_5 = arith.constant 0 : index
    %c0_6 = arith.constant 0 : index
    %4 = vector.load %arg4[%c0_4, %c0_5, %c0_6] : memref<1x1x32xf32, #tpu.memory_space<vmem>>, vector<1x1x32xf32>
    %5 = vector.shape_cast %4 : vector<1x1x32xf32> to vector<1x32xf32>
    %6 = vector.broadcast %5 : vector<1x32xf32> to vector<16x32xf32>
    %7 = arith.addf %3, %6 : vector<16x32xf32>
    %c0_7 = arith.constant 0 : index
    %c0_8 = arith.constant 0 : index
    %c0_9 = arith.constant 0 : index
    %8 = vector.load %arg5[%c0_7, %c0_8, %c0_9] : memref<1x16x32xf32, #tpu.memory_space<vmem>>, vector<1x16x32xf32>
    %9 = vector.shape_cast %8 : vector<1x16x32xf32> to vector<16x32xf32>
    %10 = vector.shape_cast %7 : vector<16x32xf32> to vector<1x16x32xf32>
    tpu.vector_store %arg5[%c0_7, %c0_8, %c0_9], %10 {strides = array<i32>} : memref<1x16x32xf32, #tpu.memory_space<vmem>>, vector<1x16x32xf32>,
    return
  }
  func.func @transform_0(%arg0: i32, %arg1: i32) -> (i32, i32) {
    %c0_i32 = arith.constant 0 : i32
    %c0_i32_0 = arith.constant 0 : i32
    return %arg0, %c0_i32 : i32, i32
  }
  func.func @transform_1(%arg0: i32, %arg1: i32) -> (i32, i32, i32) {
    %c0_i32 = arith.constant 0 : i32
    %c0_i32_0 = arith.constant 0 : i32
    %c0_i32_1 = arith.constant 0 : i32
    return %arg1, %c0_i32, %c0_i32_0 : i32, i32, i32
  }
  func.func @transform_2(%arg0: i32, %arg1: i32) -> (i32, i32, i32) {
    %c0_i32 = arith.constant 0 : i32
    %c0_i32_0 = arith.constant 0 : i32
    %c0_i32_1 = arith.constant 0 : i32
    return %arg1, %c0_i32, %c0_i32_0 : i32, i32, i32
  }
  func.func @transform_3(%arg0: i32, %arg1: i32) -> (i32, i32, i32) {
    %c0_i32 = arith.constant 0 : i32
    %c0_i32_0 = arith.constant 0 : i32
    return %arg1, %arg0, %c0_i32 : i32, i32, i32
  }
}

</mosaic_0001>

<llo_original>
// kernel: tpu_custom_call.1
$region0: #{tpu_custom_call.1}
  #allocation0 [shape = 'u32[]', space=smem, size = 0x4, offset = 0x4, fixed_abs, tag = 'smem constant byte address 0x4 - core index']
  #allocation1 [shape = 'u32[144,128]{1,0:T(1,128)}', space=vmem, size = 0x12000, scoped, tag = 'internal scratch']
  %s0 = inlined_call_operand.hbm [shape: f32[16,32], index: 0, kind: input, shape index: {}]
  %s1 = inlined_call_operand.hbm [shape: f32[4,32,32], index: 1, kind: input, shape index: {}]
  %s2 = inlined_call_operand.vmem [shape: f32[4,1,32], index: 2, kind: input, shape index: {}]
  %s3 = inlined_call_operand.hbm [shape: f32[4,16,32], index: 3, kind: output, shape index: {}]
  %s4 = sld [smem:[#allocation0]]
  $region53: #{tpu_custom_call.1} parent=0
    _
  %s6 = ssub.s32 1, %s4
  %s7 = scalar_select 0, %s6, %s4
  $region1: #{tpu_custom_call.1} parent=0
    #allocation2 [shape = 'u8[8192]{0}', space=vmem, size = 0x2000, scoped, tag = 'input window, operand 0, single buffered']
    #allocation3 [shape = 's32[2]{0}', space=sflag, size = 0x8, scoped, tag = 'scoped memory for tpu_custom_call.1']
    #allocation4 [shape = 's32[2]{0}', space=sflag, size = 0x8, scoped, tag = 'scoped memory for tpu_custom_call.1']
    #allocation5 [shape = 'u8[32768]{0}', space=vmem, size = 0x8000, scoped, tag = 'input window, operand 1']
    #allocation6 [shape = 's32[2]{0}', space=sflag, size = 0x8, scoped, tag = 'scoped memory for tpu_custom_call.1']
    #allocation7 [shape = 'u8[16384]{0}', space=vmem, size = 0x4000, scoped, tag = 'output window, operand 0']
    %8 = vsyncpa [#allocation3], 0
    %9 = vsyncpa [#allocation6], 0
    %s10 = scalar_lea.sflag [#allocation6], 1
    %11 = vsyncpa %s10, 0
    %12 = vsyncpa [#allocation4], 0
    %s13 = scalar_lea.sflag [#allocation4], 1
    %14 = vsyncpa %s13, 0
    loop: start=0, step=1, limit=6
    $region2: #{tpu_custom_call.1} parent=1 // loop_pre_header
      _
    $region3: #{tpu_custom_call.1} parent=1 // loop_header
      %s16 = sphi 0, %s20
      %p17 = scmp.ge.s32.totalorder %s16, 6
      %s23 = sphi 0, %s35
      %s24 = sphi 0, %s31
      %s25 = sphi 0, %s23
      %s26 = sphi 0, %s24
      %s27 = sphi 0, %s25
      %s28 = sphi 0, %s26
      %s38 = sphi 0, %s40
      %s41 = sphi 0, %s38
      %s42 = sphi 0, %s41
      %s58 = sphi 0, %s42
      %s64 = sphi 0, %s66
      %s67 = sphi 0, %s64
      %s68 = sphi 0, %s67
      %s84 = sphi 0, %s68
      %s90 = sphi 0, %s92
      %s93 = sphi 0, %s90
      %s94 = sphi 0, %s93
      %s110 = sphi 0, %s94
      %s118 = sphi 0, %s120
      %s121 = sphi 0, %s118
      %s122 = sphi 0, %s121
      %s138 = sphi 0, %s122
    $region4: #{tpu_custom_call.1} parent=1 // loop_header_branch
      %19 = sbr.rel (%p17) target = $region8
    $region5: #{tpu_custom_call.1} parent=1 // loop_body
      %s21 = ssub.s32 %s16, 1
      %s22 = ssub.s32 %s16, 2
      %s29 = sadd.s32 1, %s24
      %p30 = scmp.ge.s32.totalorder %s29, 4
      %s31 = scalar_select %p30, 0, %s29
      %s32 = sadd.s32 1, %s23
      %s33 = scalar_select %p30, %s32, %s23
      %p34 = scmp.ge.s32.totalorder %s33, 1
      %s35 = scalar_select %p34, 0, %s33
      %s36 = ssub.s32 %s23, %s35
      %p37 = scmp.eq.s32.totalorder %s36, 0
      %s39 = sadd.s32 %s38, 1
      %s40 = scalar_select %p37, %s38, %s39
      %p43 = pneg %p37
      %p44 = scmp.eq.s32.totalorder %s16, 3
      %p45 = por %p43, %p44
      %p46 = scmp.ne.s32.totalorder %s38, %s41
      %p47 = scmp.eq.s32.totalorder %s16, 0
      %p48 = por %p46, %p47
      %p49 = scmp.ne.s32.totalorder %s38, %s41
      %p50 = scmp.eq.s32.totalorder %s21, 3
      %p51 = por %p49, %p50
      %p52 = scmp.ne.s32.totalorder %s41, %s42
      %p53 = scmp.eq.s32.totalorder %s21, 0
      %p54 = por %p52, %p53
      %p55 = scmp.ne.s32.totalorder %s41, %s42
      %p56 = scmp.eq.s32.totalorder %s22, 3
      %p57 = por %p55, %p56
      %p59 = scmp.ne.s32.totalorder %s42, %s58
      %p60 = scmp.eq.s32.totalorder %s22, 0
      %p61 = por %p59, %p60
      %s62 = ssub.s32 %s24, %s31
      %p63 = scmp.eq.s32.totalorder %s62, 0
      %s65 = sadd.s32 %s64, 1
      %s66 = scalar_select %p63, %s64, %s65
      %p69 = pneg %p63
      %p70 = scmp.eq.s32.totalorder %s16, 3
      %p71 = por %p69, %p70
      %p72 = scmp.ne.s32.totalorder %s64, %s67
      %p73 = scmp.eq.s32.totalorder %s16, 0
      %p74 = por %p72, %p73
      %p75 = scmp.ne.s32.totalorder %s64, %s67
      %p76 = scmp.eq.s32.totalorder %s21, 3
      %p77 = por %p75, %p76
      %p78 = scmp.ne.s32.totalorder %s67, %s68
      %p79 = scmp.eq.s32.totalorder %s21, 0
      %p80 = por %p78, %p79
      %p81 = scmp.ne.s32.totalorder %s67, %s68
      %p82 = scmp.eq.s32.totalorder %s22, 3
      %p83 = por %p81, %p82
      %p85 = scmp.ne.s32.totalorder %s68, %s84
      %p86 = scmp.eq.s32.totalorder %s22, 0
      %p87 = por %p85, %p86
      %s88 = ssub.s32 %s24, %s31
      %p89 = scmp.eq.s32.totalorder %s88, 0
      %s91 = sadd.s32 %s90, 1
      %s92 = scalar_select %p89, %s90, %s91
      %p95 = pneg %p89
      %p96 = scmp.eq.s32.totalorder %s16, 3
      %p97 = por %p95, %p96
      %p98 = scmp.ne.s32.totalorder %s90, %s93
      %p99 = scmp.eq.s32.totalorder %s16, 0
      %p100 = por %p98, %p99
      %p101 = scmp.ne.s32.totalorder %s90, %s93
      %p102 = scmp.eq.s32.totalorder %s21, 3
      %p103 = por %p101, %p102
      %p104 = scmp.ne.s32.totalorder %s93, %s94
      %p105 = scmp.eq.s32.totalorder %s21, 0
      %p106 = por %p104, %p105
      %p107 = scmp.ne.s32.totalorder %s93, %s94
      %p108 = scmp.eq.s32.totalorder %s22, 3
      %p109 = por %p107, %p108
      %p111 = scmp.ne.s32.totalorder %s94, %s110
      %p112 = scmp.eq.s32.totalorder %s22, 0
      %p113 = por %p111, %p112
      %s114 = ssub.s32 %s24, %s31
      %s115 = ssub.s32 %s23, %s35
      %s116 = sor.u32 %s114, %s115
      %p117 = scmp.eq.s32.totalorder %s116, 0
      %s119 = sadd.s32 %s118, 1
      %s120 = scalar_select %p117, %s118, %s119
      %p123 = pneg %p117
      %p124 = scmp.eq.s32.totalorder %s16, 3
      %p125 = por %p123, %p124
      %p126 = scmp.ne.s32.totalorder %s118, %s121
      %p127 = scmp.eq.s32.totalorder %s16, 0
      %p128 = por %p126, %p127
      %p129 = scmp.ne.s32.totalorder %s118, %s121
      %p130 = scmp.eq.s32.totalorder %s21, 3
      %p131 = por %p129, %p130
      %p132 = scmp.ne.s32.totalorder %s121, %s122
      %p133 = scmp.eq.s32.totalorder %s21, 0
      %p134 = por %p132, %p133
      %p135 = scmp.ne.s32.totalorder %s121, %s122
      %p136 = scmp.eq.s32.totalorder %s22, 3
      %p137 = por %p135, %p136
      %p139 = scmp.ne.s32.totalorder %s122, %s138
      %p140 = scmp.eq.s32.totalorder %s22, 0
      %p141 = por %p139, %p140
      %p142 = scmp.le.s32.totalorder 1, %s16
      %p143 = scmp.lt.s32.totalorder %s16, 5
      %p144 = pnand %p142, %p143
      %p145 = pneg %p144
      // Predicated region
      $region9: #{tpu_custom_call.1} parent=5 // pred_check
        _
      $region10: #{tpu_custom_call.1} parent=5 // pred_check_branch
        %147 = sbr.rel (%p144) target = $region12
      $region11: #{tpu_custom_call.1} parent=5 // pred_region
        %s148 = ssub.s32 %s16, 1
        // Predicated region
        $region13: #{tpu_custom_call.1} parent=11 // pred_check
          %p149 = pneg %p54
        $region14: #{tpu_custom_call.1} parent=11 // pred_check_branch
          %151 = sbr.rel (%p149) target = $region16
        $region15: #{tpu_custom_call.1} parent=11 // pred_region
          %s152 = smul.u32 2, %s25
          %s154 = ssub.s32 256, 256
          %155 = vsyncadd [#allocation3], %s154
          %s156 = smul.addr %s152, 128
          %s157 = scalar_lea.hbm %s0, %s156
          %s158 = sshll.u32 [#allocation2], 4
          %s159 = int_to_ptr.vmem [resolvable:$true] %s158
          %164 = dma.hbm_to_vmem [thread:$0]  %s157, 256, %s159, [#allocation3], 128, 128, 8
        $region16: #{tpu_custom_call.1} parent=11 // pred_fallthru
          _
      $region12: #{tpu_custom_call.1} parent=5 // pred_fallthru
        _
      %p165 = scmp.lt.s32.totalorder %s16, 4
      // Predicated region
      $region17: #{tpu_custom_call.1} parent=5 // pred_check
        %p166 = pneg %p165
      $region18: #{tpu_custom_call.1} parent=5 // pred_check_branch
        %168 = sbr.rel (%p166) target = $region20
      $region19: #{tpu_custom_call.1} parent=5 // pred_region
        // Predicated region
        $region21: #{tpu_custom_call.1} parent=19 // pred_check
          %p169 = pneg %p74
        $region22: #{tpu_custom_call.1} parent=19 // pred_check_branch
          %171 = sbr.rel (%p169) target = $region24
        $region23: #{tpu_custom_call.1} parent=19 // pred_region
          %s172 = sand.u32 %s64, 1
          %s173 = scalar_lea.sflag [#allocation6], %s172
          %s174 = sand.u32 %s64, 1
          %s175 = smul.addr %s174, 32
          %s176 = scalar_lea.vmem [#allocation5], %s175
          %s178 = ssub.s32 512, 512
          %179 = vsyncadd %s173, %s178
          %s180 = smul.addr %s24, 4
          %s181 = smul.addr %s180, 128
          %s182 = scalar_lea.hbm %s1, %s181
          %s183 = sshll.u32 %s176, 4
          %s184 = int_to_ptr.vmem [resolvable:$true] %s183
          %189 = dma.hbm_to_vmem [thread:$0]  %s182, 512, %s184, %s173, 128, 128, 8
        $region24: #{tpu_custom_call.1} parent=19 // pred_fallthru
          _
        // Predicated region
        $region25: #{tpu_custom_call.1} parent=19 // pred_check
          %p190 = pneg %p100
        $region26: #{tpu_custom_call.1} parent=19 // pred_check_branch
          %192 = sbr.rel (%p190) target = $region28
        $region27: #{tpu_custom_call.1} parent=19 // pred_region
          %p193 = scmp.lt.s32.totalorder %s24, 3
          %s194 = scalar_select %p193, %s24, 3
          %s195 = scalar_lea.vmem %s2, %s194
        $region28: #{tpu_custom_call.1} parent=19 // pred_fallthru
          _
      $region20: #{tpu_custom_call.1} parent=5 // pred_fallthru
        _
      %p196 = scmp.le.s32.totalorder 1, %s16
      %p197 = scmp.lt.s32.totalorder %s16, 5
      %p198 = pnand %p196, %p197
      %p199 = pneg %p198
      // Predicated region
      $region29: #{tpu_custom_call.1} parent=5 // pred_check
        _
      $region30: #{tpu_custom_call.1} parent=5 // pred_check_branch
        %201 = sbr.rel (%p198) target = $region32
      $region31: #{tpu_custom_call.1} parent=5 // pred_region
        %s202 = ssub.s32 %s16, 1
        // Predicated region
        $region33: #{tpu_custom_call.1} parent=31 // pred_check
          %p203 = pneg %p54
        $region34: #{tpu_custom_call.1} parent=31 // pred_check_branch
          %205 = sbr.rel (%p203) target = $region36
        $region35: #{tpu_custom_call.1} parent=31 // pred_region
          %206 = dma.done [#allocation3], 256
        $region36: #{tpu_custom_call.1} parent=31 // pred_fallthru
          _
        %s207 = sand.u32 %s67, 1
        %s208 = scalar_lea.sflag [#allocation6], %s207
        %s209 = sand.u32 %s67, 1
        %s210 = smul.addr %s209, 32
        %s211 = scalar_lea.vmem [#allocation5], %s210
        // Predicated region
        $region37: #{tpu_custom_call.1} parent=31 // pred_check
          %p212 = pneg %p80
        $region38: #{tpu_custom_call.1} parent=31 // pred_check_branch
          %214 = sbr.rel (%p212) target = $region40
        $region39: #{tpu_custom_call.1} parent=31 // pred_region
          %215 = dma.done %s208, 512
        $region40: #{tpu_custom_call.1} parent=31 // pred_fallthru
          _
        %p216 = pneg %p54
        %p217 = pneg %p51
        %s218 = sand.u32 %s67, 1
        %s219 = scalar_lea.sflag [#allocation6], %s218
        %s220 = sand.u32 %s67, 1
        %s221 = smul.addr %s220, 32
        %s222 = scalar_lea.vmem [#allocation5], %s221
        %p223 = pneg %p80
        %p224 = pneg %p77
        %p225 = scmp.lt.s32.totalorder %s26, 3
        %s226 = scalar_select %p225, %s26, 3
        %s227 = scalar_lea.vmem %s2, %s226
        %p228 = pneg %p106
        %p229 = pneg %p103
        %p230 = pneg %p134
        %p231 = pneg %p131
        %s232 = sand.u32 %s121, 1
        %s233 = scalar_lea.sflag [#allocation4], %s232
        %s234 = sand.u32 %s121, 1
        %s235 = smul.addr %s234, 16
        %s236 = scalar_lea.vmem [#allocation7], %s235
        %s237 = smul.u32 2, %s25
        %p238 = scmp.lt.s32.totalorder %s26, 3
        %s239 = scalar_select %p238, %s26, 3
        %s240 = scalar_lea.vmem %s2, %s239
        %s241 = smul.u32 2, %s25
        %v242 = vld [vmem:[#allocation2] sm:$0xff]
        %v243 = vld [vmem:[#allocation2 + $0x8] sm:$0xff]
        %v244 = vld [vmem:[%s211] sm:$0xff]
        %v245 = vld [vmem:[%s211 + $0x8] sm:$0xff]
        %v246 = vld [vmem:[%s211 + $0x10] sm:$0xff]
        %v247 = vld [vmem:[%s211 + $0x18] sm:$0xff]
        %v248 = vld [vmem:[%s240] sm:$0x1]
        %v250 = vlaneseq
        %v251 = vshrl.u32 %v250, 7
        %v252 = vsub.s32 0, %v251
        %v253 = vrot.slane %v248, %v252
        %vm255 = vcmask 261120
        %v257 = vsel %vm255, %v242, 0
        %v260 = vsel %vm255, %v243, 0
        %262 = vmatprep.subr.mxu0 0.0
        %263 = vmatpush1.msra.mxu0 %v244
        %264 = vmatprep.subr.mxu0 0.0
        %265 = vmatpush1.msra.mxu0 %v245
        %266 = vmatprep.subr.mxu0 0.0
        %267 = vmatpush1.msra.mxu0 %v246
        %268 = vmatprep.subr.mxu0 0.0
        %269 = vmatpush1.msra.mxu0 %v247
        %270 = vmatprep.subr.mxu0 0.0
        %271 = vmatpush1.msra.mxu0 0.0
        %272 = vmatprep.subr.mxu0 0.0
        %273 = vmatpush1.msra.mxu0 0.0
        %274 = vmatprep.subr.mxu0 0.0
        %275 = vmatpush1.msra.mxu0 0.0
        %276 = vmatprep.subr.mxu0 0.0
        %277 = vmatpush1.msra.mxu0 0.0
        %278 = vmatprep.subr.mxu0 0.0
        %279 = vmatpush1.msra.mxu0 0.0
        %280 = vmatprep.subr.mxu0 0.0
        %281 = vmatpush1.msra.mxu0 0.0
        %282 = vmatprep.subr.mxu0 0.0
        %283 = vmatpush1.msra.mxu0 0.0
        %284 = vmatprep.subr.mxu0 0.0
        %285 = vmatpush1.msra.mxu0 0.0
        %286 = vmatprep.subr.mxu0 0.0
        %287 = vmatpush1.msra.mxu0 0.0
        %288 = vmatprep.subr.mxu0 0.0
        %289 = vmatpush1.msra.mxu0 0.0
        %290 = vmatprep.subr.mxu0 0.0
        %291 = vmatpush1.msra.mxu0 0.0
        %292 = vmatprep.subr.mxu0 0.0
        %293 = vmatpush1.msra.mxu0 0.0
        %294 = vmatprep.subr.mxu0 0.0
        %295 = vmatpush1.msra.mxu0 0.0
        %296 = vmatprep.subr.mxu0 0.0
        %297 = vmatpush1.msra.mxu0 0.0
        %298 = vmatprep.subr.mxu0 0.0
        %299 = vmatpush1.msra.mxu0 0.0
        %300 = vmatprep.subr.mxu0 0.0
        %301 = vmatpush1.msra.mxu0 0.0
        %302 = vmatprep.subr.mxu0 0.0
        %303 = vmatpush1.msra.mxu0 0.0
        %304 = vmatprep.subr.mxu0 0.0
        %305 = vmatpush1.msra.mxu0 0.0
        %306 = vmatprep.subr.mxu0 0.0
        %307 = vmatpush1.msra.mxu0 0.0
        %308 = vmatprep.subr.mxu0 0.0
        %309 = vmatpush1.msra.mxu0 0.0
        %310 = vmatprep.subr.mxu0 0.0
        %311 = vmatpush1.msra.mxu0 0.0
        %312 = vmatprep.subr.mxu0 0.0
        %313 = vmatpush1.msra.mxu0 0.0
        %314 = vmatprep.subr.mxu0 0.0
        %315 = vmatpush1.msra.mxu0 0.0
        %316 = vmatprep.subr.mxu0 0.0
        %317 = vmatpush1.msra.mxu0 0.0
        %318 = vmatprep.subr.mxu0 0.0
        %319 = vmatpush1.msra.mxu0 0.0
        %320 = vmatprep.subr.mxu0 0.0
        %321 = vmatpush1.msra.mxu0 0.0
        %322 = vmatprep.subr.mxu0 0.0
        %323 = vmatpush1.msra.mxu0 0.0
        %324 = vmatprep.subr.mxu0 0.0
        %325 = vmatpush1.msra.mxu0 0.0
        %326 = vmatprep.mubr.f32.mxu0 0.0
        %327 = vmatmul.mubr.f32.gmra.mrb[0].mxu0 %v257
        %v328 = vpop.f32.mrb[0].mxu0
        %v329 = vadd.f32 %v253, %v328
        %v330 = vpop.f32.mrb[0].mxu0
        %331 = vmatprep.mubr.f32.mxu0 0.0
        %332 = vmatmul.mubr.f32.gmra.mrb[0].mxu0 %v260
        %v333 = vpop.f32.mrb[0].mxu0
        %v334 = vadd.f32 %v253, %v333
        %v335 = vpop.f32.mrb[0].mxu0
        %336 = vdwg.mxu0
        %337 = vst.msk [vmem:[%s236] sm:$0xff] %vm255, %v329
        %338 = vst.msk [vmem:[%s236 + $0x8] sm:$0xff] %vm255, %v334
        %s339 = sand.u32 %s121, 1
        %s340 = scalar_lea.sflag [#allocation4], %s339
        %s341 = sand.u32 %s121, 1
        %s342 = smul.addr %s341, 16
        %s343 = scalar_lea.vmem [#allocation7], %s342
        // Predicated region
        $region41: #{tpu_custom_call.1} parent=31 // pred_check
          %p344 = pneg %p131
        $region42: #{tpu_custom_call.1} parent=31 // pred_check_branch
          %346 = sbr.rel (%p344) target = $region44
        $region43: #{tpu_custom_call.1} parent=31 // pred_region
          %s347 = smul.u32 2, %s25
          %s349 = ssub.s32 256, 256
          %350 = vsyncadd %s340, %s349
          %s351 = smul.addr %s26, 2
          %s352 = sadd.s32 %s347, %s351
          %s353 = smul.addr %s352, 128
          %s354 = scalar_lea.hbm %s3, %s353
          %s355 = sshll.u32 %s343, 4
          %s356 = int_to_ptr.vmem [resolvable:$true] %s355
          %361 = dma.vmem_to_hbm [thread:$0]  %s356, 256, %s354, %s340, 128, 128, 8
        $region44: #{tpu_custom_call.1} parent=31 // pred_fallthru
          _
      $region32: #{tpu_custom_call.1} parent=5 // pred_fallthru
        _
      %p362 = scmp.le.s32.totalorder 2, %s16
      // Predicated region
      $region45: #{tpu_custom_call.1} parent=5 // pred_check
        %p363 = pneg %p362
      $region46: #{tpu_custom_call.1} parent=5 // pred_check_branch
        %365 = sbr.rel (%p363) target = $region48
      $region47: #{tpu_custom_call.1} parent=5 // pred_region
        %s366 = ssub.s32 %s16, 2
        // Predicated region
        $region49: #{tpu_custom_call.1} parent=47 // pred_check
          %p367 = pneg %p137
        $region50: #{tpu_custom_call.1} parent=47 // pred_check_branch
          %369 = sbr.rel (%p367) target = $region52
        $region51: #{tpu_custom_call.1} parent=47 // pred_region
          %s370 = sand.u32 %s122, 1
          %s371 = scalar_lea.sflag [#allocation4], %s370
          %s372 = sand.u32 %s122, 1
          %s373 = smul.addr %s372, 16
          %s374 = scalar_lea.vmem [#allocation7], %s373
          %375 = dma.done %s371, 256
        $region52: #{tpu_custom_call.1} parent=47 // pred_fallthru
          _
      $region48: #{tpu_custom_call.1} parent=5 // pred_fallthru
        _
    $region6: #{tpu_custom_call.1} parent=1 // loop_footer
      %s20 = sadd.s32 1, %s16
    $region7: #{tpu_custom_call.1} parent=1 // loop_footer_branch
      %15 = sbr.rel target = $region3
    $region8: #{tpu_custom_call.1} parent=1 // loop_exit
      _
    %376 = vsyncpa [#allocation3], 1
    %s377 = scalar_lea.sflag [#allocation3], 1
    %378 = vsyncpa %s377, 1
    %379 = vsyncpa [#allocation6], 1
    %s380 = scalar_lea.sflag [#allocation6], 1
    %381 = vsyncpa %s380, 1
    %382 = vsyncpa [#allocation4], 1
    %s383 = scalar_lea.sflag [#allocation4], 1
    %384 = vsyncpa %s383, 1

</llo_original>
